<compile_context>
chip_gen: v6e
topology: v6e:2x2x1
jax: 0.10.0
libtpu: 0.0.40
codegen_flags: <defaults>
</compile_context>

<pallas_src>
import jax
import jax.numpy as jnp
from jax.experimental import pallas as pl
from jax.experimental.pallas import tpu as pltpu


# ----------------------------------------------------------------------------
# Pallas kernels
# ----------------------------------------------------------------------------
def _matmul_bias_kernel(x_ref, w_ref, b_ref, o_ref):
    # x: (TM, K) bf16, w: (K, N) bf16, b: (1, N) f32 -> o: (TM, N)
    acc = jnp.dot(x_ref[...], w_ref[...], preferred_element_type=jnp.float32)
    o_ref[...] = (acc + b_ref[...]).astype(o_ref.dtype)


def _make_conv3d_relu_kernel(n_inputs):
    """Conv3d(k=3,s=1,p=1)+ReLU over one (batch, D-tile) block.

    Inputs (n_inputs of them, channel-concat semantics):
      x_ref_i: (1, tD+2, H+2, W+2, Ci)  bf16, pre-padded (conv pad + D halo)
      w_ref  : (3, 9*sum(Ci), Cout)     bf16, kh/kw/cin folded into K per kd tap
      b_ref  : (1, Cout)                f32
      o_ref  : (1, tD*H*W, Cout)
    """
    def kernel(*refs):
        x_refs = refs[:n_inputs]
        w_ref, b_ref, o_ref = refs[n_inputs], refs[n_inputs + 1], refs[n_inputs + 2]

        tD = x_refs[0].shape[1] - 2
        H = x_refs[0].shape[2] - 2
        W = x_refs[0].shape[3] - 2
        Cout = o_ref.shape[-1]

        acc = jnp.zeros((tD * H * W, Cout), jnp.float32)
        for kd in range(3):
            # Fold (input, kh, kw, cin) into the contraction dim: one matmul per kd.
            taps = []
            for x_ref in x_refs:
                for kh in range(3):
                    for kw in range(3):
                        taps.append(x_ref[0, kd:kd + tD, kh:kh + H, kw:kw + W, :])
            cols = jnp.concatenate(taps, axis=-1) if len(taps) > 1 else taps[0]
            cols = cols.reshape(tD * H * W, cols.shape[-1])
            acc = acc + jnp.dot(cols, w_ref[kd],
                                preferred_element_type=jnp.float32)

        acc = jnp.maximum(acc + b_ref[...], 0.0)
        o_ref[...] = acc.reshape(o_ref.shape).astype(o_ref.dtype)

    return kernel


# ----------------------------------------------------------------------------
# Wrappers
# ----------------------------------------------------------------------------
_VMEM_LIMIT = 48 * 1024 * 1024  # safe on v5e/v6e (128 MiB) and v7x (64 MiB)


def _pick_d_tile(D, H, W, cin_total, cout, budget_bytes):
    """Largest D-tile whose working set fits the VMEM budget (v7x-safe)."""
    def need(td):
        x_in = 2 * (td + 2) * (H + 2) * (W + 2) * cin_total * 2   # 2x-buffered bf16 in
        out = 2 * td * H * W * cout * 4                           # 2x-buffered out
        im2col = td * H * W * 9 * cin_total * 2                   # folded-K operand
        acc = td * H * W * cout * 4
        wgt = 3 * 9 * cin_total * cout * 2
        return x_in + out + im2col + acc + wgt

    td = D
    while td > 1 and need(td) > budget_bytes:
        td -= 1
    return max(td, 1)


def _fold_conv_weight(w, c_splits):
    """(3,3,3,Cin,Cout) DHWIO -> (3, 9*Cin, Cout) with K ordered as
    [input0:(kh,kw,c), input1:(kh,kw,c), ...] to match the in-kernel im2col."""
    Cout = w.shape[-1]
    parts, off = [], 0
    for c in c_splits:
        parts.append(w[:, :, :, off:off + c, :].reshape(3, 9 * c, Cout))
        off += c
    return jnp.concatenate(parts, axis=1).astype(jnp.bfloat16)


def conv3d_relu(xs, w, b, *, d_tile=None, out_dtype=jnp.float32):
    """Conv3d(kernel=3, stride=1, padding=1) + ReLU.

    xs: list of (N, D, H, W, Ci) arrays; they are treated as if channel-concatenated
        (the concat is fused into the kernel instead of materialized in HBM).
    w : (3, 3, 3, sum(Ci), Cout) DHWIO.  b: (Cout,).
    """
    N, D, H, W = xs[0].shape[:4]
    c_splits = [int(x.shape[-1]) for x in xs]
    cin_total = sum(c_splits)
    Cout = int(w.shape[-1])
    assert w.shape == (3, 3, 3, cin_total, Cout)

    if d_tile is None:
        d_tile = _pick_d_tile(D, H, W, cin_total, Cout, budget_bytes=24 * 1024 * 1024)
    d_tile = max(1, min(int(d_tile), D))
    nt = -(-D // d_tile)                    # cdiv
    extra_d = nt * d_tile - D               # bottom zero-pad so every tile is full

    def prep(x):
        # conv padding (1 each side) + extra depth rows, then explicit halo tiles:
        # tile t covers padded depth rows [t*d_tile, t*d_tile + d_tile + 2).
        xp = jnp.pad(x.astype(jnp.bfloat16),
                     ((0, 0), (1, 1 + extra_d), (1, 1), (1, 1), (0, 0)))
        tiles = jnp.stack(
            [xp[:, t * d_tile: t * d_tile + d_tile + 2] for t in range(nt)], axis=1)
        return tiles.reshape(N * nt, d_tile + 2, H + 2, W + 2, x.shape[-1])

    xts = [prep(x) for x in xs]
    wf = _fold_conv_weight(w, c_splits)
    b2 = b.astype(jnp.float32).reshape(1, Cout)

    NT = N * nt
    Mrows = d_tile * H * W
    kernel = _make_conv3d_relu_kernel(len(xs))

    in_specs = [pl.BlockSpec((1, d_tile + 2, H + 2, W + 2, c),
                             lambda i: (i, 0, 0, 0, 0)) for c in c_splits]
    in_specs += [pl.BlockSpec((3, 9 * cin_total, Cout), lambda i: (0, 0, 0)),
                 pl.BlockSpec((1, Cout), lambda i: (0, 0))]

    out = pl.pallas_call(
        kernel,
        out_shape=jax.ShapeDtypeStruct((NT, Mrows, Cout), out_dtype),
        grid=(NT,),
        in_specs=in_specs,
        out_specs=pl.BlockSpec((1, Mrows, Cout), lambda i: (i, 0, 0)),
        compiler_params=pltpu.CompilerParams(
            dimension_semantics=("parallel",),
            vmem_limit_bytes=_VMEM_LIMIT),
    )(*xts, wf, b2)

    out = out.reshape(N, nt * d_tile, H, W, Cout)[:, :D]
    return out


def conv_transpose3d_k2s2(x, w, b, *, m_tile=512):
    """ConvTranspose3d(kernel=2, stride=2).

    x: (N, D, H, W, Cin); w: (Cin, Cout, 2, 2, 2) [PyTorch layout]; b: (Cout,).
    stride == kernel -> each output 2x2x2 block depends on one input voxel, so it is
    an M-tiled (rows, Cin) @ (Cin, 8*Cout) matmul followed by a scatter.
    """
    N, D, H, W, Cin = x.shape
    Cout = int(w.shape[1])
    M = N * D * H * W
    TM = min(int(m_tile), M)
    TM = ((TM + 7) // 8) * 8
    Mp = -(-M // TM) * TM

    x_flat = x.astype(jnp.bfloat16).reshape(M, Cin)
    if Mp > M:
        x_flat = jnp.pad(x_flat, ((0, Mp - M), (0, 0)))
    w_flat = w.reshape(Cin, Cout * 8).astype(jnp.bfloat16)
    b_flat = jnp.repeat(b.astype(jnp.float32), 8).reshape(1, Cout * 8)

    y = pl.pallas_call(
        _matmul_bias_kernel,
        out_shape=jax.ShapeDtypeStruct((Mp, Cout * 8), jnp.bfloat16),
        grid=(Mp // TM,),
        in_specs=[pl.BlockSpec((TM, Cin), lambda i: (i, 0)),
                  pl.BlockSpec((Cin, Cout * 8), lambda i: (0, 0)),
                  pl.BlockSpec((1, Cout * 8), lambda i: (0, 0))],
        out_specs=pl.BlockSpec((TM, Cout * 8), lambda i: (i, 0)),
        compiler_params=pltpu.CompilerParams(
            dimension_semantics=("parallel",),
            vmem_limit_bytes=_VMEM_LIMIT),
    )(x_flat, w_flat, b_flat)

    y = y[:M].reshape(N, D, H, W, Cout, 2, 2, 2)
    # TODO(synk): fold this 2x2x2 scatter into the consumer's BlockSpec / index_map
    # so outputs2 never makes an extra HBM transpose pass.
    y = jnp.transpose(y, (0, 1, 5, 2, 6, 3, 7, 4))
    return y.reshape(N, 2 * D, 2 * H, 2 * W, Cout)


def unet_up3d_forward(inputs1, inputs2, params, *, d_tile=None):
    """inputs1/inputs2: PyTorch-style NCDHW float32.  Returns NCDHW float32."""
    x1 = jnp.transpose(inputs1, (0, 2, 3, 4, 1)).astype(jnp.float32)  # -> NDHWC
    x2 = jnp.transpose(inputs2, (0, 2, 3, 4, 1)).astype(jnp.float32)

    # self.up(inputs2)
    outputs2 = conv_transpose3d_k2s2(x2, params["up_w"], params["up_b"])

    # pad inputs1 to match outputs2 spatial size (same arithmetic as F.pad)
    o1 = outputs2.shape[1] - x1.shape[1]
    o2 = outputs2.shape[2] - x1.shape[2]
    o3 = outputs2.shape[3] - x1.shape[3]
    outputs1 = jnp.pad(
        x1,
        ((0, 0),
         (o1 // 2, o1 - o1 // 2),
         (o2 // 2, o2 - o2 // 2),
         (o3 // 2, o3 - o3 // 2),
         (0, 0)))

    # torch.cat([outputs1, outputs2], 1) is fused into the first conv (split weights).
    h = conv3d_relu([outputs1, outputs2], params["c1_w"], params["c1_b"],
                    d_tile=d_tile, out_dtype=jnp.bfloat16)
    h = conv3d_relu([h], params["c2_w"], params["c2_b"],
                    d_tile=d_tile, out_dtype=jnp.float32)

    return jnp.transpose(h, (0, 4, 1, 2, 3))  # back to NCDHW


# ----------------------------------------------------------------------------
# Deterministic parameter init (shapes from unetUp3d.__init__)
# ----------------------------------------------------------------------------
def init_params(key, in_size, out_size):
    ks = jax.random.split(key, 6)

    def nrm(k, shape, fan_in):
        return jax.random.normal(k, shape, jnp.float32) / jnp.sqrt(float(fan_in))

    return {
        # ConvTranspose3d(in_size, out_size, 2, 2): PyTorch weight (Cin, Cout, 2,2,2)
        "up_w": nrm(ks[0], (in_size, out_size, 2, 2, 2), in_size * 8),
        "up_b": nrm(ks[1], (out_size,), in_size * 8),
        # Conv3d weights stored as DHWIO
        "c1_w": nrm(ks[2], (3, 3, 3, in_size, out_size), in_size * 27),
        "c1_b": nrm(ks[3], (out_size,), in_size * 27),
        "c2_w": nrm(ks[4], (3, 3, 3, out_size, out_size), out_size * 27),
        "c2_b": nrm(ks[5], (out_size,), out_size * 27),
    }


# ----------------------------------------------------------------------------
# Pure-JAX f32 reference (lax.conv) for verification
# ----------------------------------------------------------------------------
def reference_forward(inputs1, inputs2, params):
    x1 = jnp.transpose(inputs1, (0, 2, 3, 4, 1))
    x2 = jnp.transpose(inputs2, (0, 2, 3, 4, 1))

    y = jnp.einsum("ndhwi,ioxyz->ndxhywzo", x2, params["up_w"])
    N, D, _, H, _, W, _, Co = y.shape
    outputs2 = y.reshape(N, 2 * D, 2 * H, 2 * W, Co) + params["up_b"]

    o1 = outputs2.shape[1] - x1.shape[1]
    o2 = outputs2.shape[2] - x1.shape[2]
    o3 = outputs2.shape[3] - x1.shape[3]
    x1p = jnp.pad(
        x1,
        ((0, 0),
         (o1 // 2, o1 - o1 // 2),
         (o2 // 2, o2 - o2 // 2),
         (o3 // 2, o3 - o3 // 2),
         (0, 0)))
    h = jnp.concatenate([x1p, outputs2], axis=-1)

    def conv(x, w, b):
        y = jax.lax.conv_general_dilated(
            x, w, (1, 1, 1), "SAME",
            dimension_numbers=("NDHWC", "DHWIO", "NDHWC"))
        return jnp.maximum(y + b, 0.0)

    h = conv(h, params["c1_w"], params["c1_b"])
    h = conv(h, params["c2_w"], params["c2_b"])
    return jnp.transpose(h, (0, 4, 1, 2, 3))


# ----------------------------------------------------------------------------
if __name__ == "__main__":
    key = jax.random.PRNGKey(0)
    k1, k2, kp, kx, kw_, kb_ = jax.random.split(key, 6)

    in_size, out_size = 8, 4  # concat channels: (in_size - out_size) + out_size == in_size

    # PyTorch-style NCDHW inputs.
    inputs2 = jax.random.normal(k1, (2, in_size, 4, 4, 4), jnp.float32)             # deep features
    inputs1 = jax.random.normal(k2, (2, in_size - out_size, 7, 8, 8), jnp.float32)  # skip (odd D -> pad)

    params = init_params(kp, in_size, out_size)

    ref = reference_forward(inputs1, inputs2, params)
    scale = float(jnp.max(jnp.abs(ref))) + 1e-6

    # 1) auto D-tile (fits in one tile at this toy size)
    out = jax.block_until_ready(unet_up3d_forward(inputs1, inputs2, params))
    assert out.shape == (2, out_size, 8, 8, 8), out.shape
    err = float(jnp.max(jnp.abs(out - ref)))
    assert err < 3e-2 * scale, f"max abs err {err} (scale {scale})"

    # 2) forced small D-tile: exercises halo tiling + non-divisible last tile (8 % 3)
    out_t = jax.block_until_ready(
        unet_up3d_forward(inputs1, inputs2, params, d_tile=3))
    err_t = float(jnp.max(jnp.abs(out_t - ref)))
    assert err_t < 3e-2 * scale, f"max abs err (tiled) {err_t}"

    # 3) standalone conv3d_relu halo check vs lax.conv (single-input path)
    xc = jax.random.normal(kx, (1, 7, 8, 8, 6), jnp.float32)
    wc = jax.random.normal(kw_, (3, 3, 3, 6, 5), jnp.float32) / jnp.sqrt(6.0 * 27.0)
    bc = jax.random.normal(kb_, (5,), jnp.float32) * 0.1
    got = jax.block_until_ready(conv3d_relu([xc], wc, bc, d_tile=3))
    want = jnp.maximum(
        jax.lax.conv_general_dilated(
            xc, wc, (1, 1, 1), "SAME",
            dimension_numbers=("NDHWC", "DHWIO", "NDHWC")) + bc, 0.0)
    errc = float(jnp.max(jnp.abs(got - want)))
    assert errc < 3e-2 * (float(jnp.max(jnp.abs(want))) + 1e-6), errc

    print("KERNEL_OK")
</pallas_src>

<mosaic_0001>
module attributes {stable_mosaic.version = 11 : i64} {
  func.func @_matmul_bias_kernel(%arg0: i32, %arg1: memref<128x8xbf16, #tpu.memory_space<vmem>>, %arg2: memref<8x32xbf16, #tpu.memory_space<vmem>>, %arg3: memref<1x32xf32, #tpu.memory_space<vmem>>, %arg4: memref<128x32xbf16, #tpu.memory_space<vmem>>) attributes {dimension_semantics = [#tpu.dimension_semantics<parallel>], iteration_bounds = array<i64: 1>, scalar_prefetch = 0 : i64, scratch_operands = 0 : i64, tpu.core_type = #tpu.core_type<tc>, window_params = [{transform_indices = @transform_0, window_bounds = array<i64: 128, 8>}, {pipeline_mode = #tpu.pipeline_mode<synchronous>, transform_indices = @transform_1, window_bounds = array<i64: 8, 32>}, {pipeline_mode = #tpu.pipeline_mode<synchronous>, transform_indices = @transform_2, window_bounds = array<i64: 1, 32>}, {transform_indices = @transform_3, window_bounds = array<i64: 128, 32>}]} {
    %c0 = arith.constant 0 : index
    %c0_0 = arith.constant 0 : index
    %0 = vector.load %arg1[%c0, %c0_0] : memref<128x8xbf16, #tpu.memory_space<vmem>>, vector<128x8xbf16>
    %c0_1 = arith.constant 0 : index
    %c0_2 = arith.constant 0 : index
    %1 = vector.load %arg2[%c0_1, %c0_2] : memref<8x32xbf16, #tpu.memory_space<vmem>>, vector<8x32xbf16>
    %cst = arith.constant dense<0.000000e+00> : vector<128x32xf32>
    %2 = tpu.matmul %0, %1, %cst {dimension_numbers = #tpu.dot_dimension_numbers<[1], [0], [0], [1], [0, 0, 1, 1], [], []>} : vector<128x8xbf16>, vector<8x32xbf16>, vector<128x32xf32> -> vector<128x32xf32>
    %c0_3 = arith.constant 0 : index
    %c0_4 = arith.constant 0 : index
    %3 = vector.load %arg3[%c0_3, %c0_4] : memref<1x32xf32, #tpu.memory_space<vmem>>, vector<1x32xf32>
    %4 = vector.broadcast %3 : vector<1x32xf32> to vector<128x32xf32>
    %5 = arith.addf %2, %4 : vector<128x32xf32>
    %6 = arith.truncf %5 : vector<128x32xf32> to vector<128x32xbf16>
    %c0_5 = arith.constant 0 : index
    %c0_6 = arith.constant 0 : index
    %7 = vector.load %arg4[%c0_5, %c0_6] : memref<128x32xbf16, #tpu.memory_space<vmem>>, vector<128x32xbf16>
    tpu.vector_store %arg4[%c0_5, %c0_6], %6 {strides = array<i32>} : memref<128x32xbf16, #tpu.memory_space<vmem>>, vector<128x32xbf16>,
    return
  }
  func.func @transform_0(%arg0: i32) -> (i32, i32) {
    %c0_i32 = arith.constant 0 : i32
    %c0_i32_0 = arith.constant 0 : i32
    return %arg0, %c0_i32 : i32, i32
  }
  func.func @transform_1(%arg0: i32) -> (i32, i32) {
    %c0_i32 = arith.constant 0 : i32
    %c0_i32_0 = arith.constant 0 : i32
    %c0_i32_1 = arith.constant 0 : i32
    return %c0_i32, %c0_i32_0 : i32, i32
  }
  func.func @transform_2(%arg0: i32) -> (i32, i32) {
    %c0_i32 = arith.constant 0 : i32
    %c0_i32_0 = arith.constant 0 : i32
    %c0_i32_1 = arith.constant 0 : i32
    return %c0_i32, %c0_i32_0 : i32, i32
  }
  func.func @transform_3(%arg0: i32) -> (i32, i32) {
    %c0_i32 = arith.constant 0 : i32
    %c0_i32_0 = arith.constant 0 : i32
    return %arg0, %c0_i32 : i32, i32
  }
}

</mosaic_0001>

<llo_original>
// kernel: tpu_custom_call.1
$region0: #{tpu_custom_call.1}
  #allocation0 [shape = 'u32[]', space=smem, size = 0x4, offset = 0x4, fixed_abs, tag = 'smem constant byte address 0x4 - core index']
  #allocation1 [shape = 'u32[144,128]{1,0:T(1,128)}', space=vmem, size = 0x12000, scoped, tag = 'internal scratch']
  %s0 = inlined_call_operand.vmem [shape: bf16[128,8], index: 0, kind: input, shape index: {}]
  %s1 = inlined_call_operand.vmem [shape: bf16[8,32], index: 1, kind: input, shape index: {}]
  %s2 = inlined_call_operand.vmem [shape: f32[1,32], index: 2, kind: input, shape index: {}]
  %s3 = inlined_call_operand.vmem [shape: bf16[128,32], index: 3, kind: output, shape index: {}]
  %s4 = sld [smem:[#allocation0]]
  $region22: #{tpu_custom_call.1} parent=0
    _
  %s6 = ssub.s32 1, %s4
  %s7 = scalar_select 0, %s6, %s4
  // Predicated region
  $region2: #{tpu_custom_call.1} parent=0 // pred_check
    _
  $region3: #{tpu_custom_call.1} parent=0 // pred_check_branch
    %9 = sbr.rel (0) target = $region5
  $region4: #{tpu_custom_call.1} parent=0 // pred_region
    _
  $region5: #{tpu_custom_call.1} parent=0 // pred_fallthru
    _
  // Predicated region
  $region6: #{tpu_custom_call.1} parent=0 // pred_check
    _
  $region7: #{tpu_custom_call.1} parent=0 // pred_check_branch
    %11 = sbr.rel (0) target = $region9
  $region8: #{tpu_custom_call.1} parent=0 // pred_region
    _
  $region9: #{tpu_custom_call.1} parent=0 // pred_fallthru
    _
  // Predicated region
  $region10: #{tpu_custom_call.1} parent=0 // pred_check
    _
  $region11: #{tpu_custom_call.1} parent=0 // pred_check_branch
    %13 = sbr.rel (0) target = $region13
  $region12: #{tpu_custom_call.1} parent=0 // pred_region
    _
  $region13: #{tpu_custom_call.1} parent=0 // pred_fallthru
    _
  %v15 = vld [vmem:[%s0] sm:$0xf]
  %v16 = vld [vmem:[%s0 + $0x4] sm:$0xf]
  %v17 = vld [vmem:[%s0 + $0x8] sm:$0xf]
  %v18 = vld [vmem:[%s0 + $0xc] sm:$0xf]
  %v19 = vld [vmem:[%s0 + $0x10] sm:$0xf]
  %v20 = vld [vmem:[%s0 + $0x14] sm:$0xf]
  %v21 = vld [vmem:[%s0 + $0x18] sm:$0xf]
  %v22 = vld [vmem:[%s0 + $0x1c] sm:$0xf]
  %v23 = vld [vmem:[%s0 + $0x20] sm:$0xf]
  %v24 = vld [vmem:[%s0 + $0x24] sm:$0xf]
  %v25 = vld [vmem:[%s0 + $0x28] sm:$0xf]
  %v26 = vld [vmem:[%s0 + $0x2c] sm:$0xf]
  %v27 = vld [vmem:[%s0 + $0x30] sm:$0xf]
  %v28 = vld [vmem:[%s0 + $0x34] sm:$0xf]
  %v29 = vld [vmem:[%s0 + $0x38] sm:$0xf]
  %v30 = vld [vmem:[%s0 + $0x3c] sm:$0xf]
  %v31 = vld [vmem:[%s1] sm:$0xf]
  %v32 = vld [vmem:[%s2] sm:$0x1]
  %v34 = vlaneseq
  %v35 = vshrl.u32 %v34, 7
  %v36 = vsub.s32 0, %v35
  %v37 = vrot.slane %v32, %v36
  %v55 = vunpack.c.l.b16 %v15
  %v56 = vunpack.c.l.b16 %v16
  %v57 = vunpack.c.l.b16 %v17
  %v58 = vunpack.c.l.b16 %v18
  %v59 = vunpack.c.l.b16 %v19
  %v60 = vunpack.c.l.b16 %v20
  %v61 = vunpack.c.l.b16 %v21
  %v62 = vunpack.c.l.b16 %v22
  %v63 = vunpack.c.l.b16 %v23
  %v64 = vunpack.c.l.b16 %v24
  %v65 = vunpack.c.l.b16 %v25
  %v66 = vunpack.c.l.b16 %v26
  %v67 = vunpack.c.l.b16 %v27
  %v68 = vunpack.c.l.b16 %v28
  %v69 = vunpack.c.l.b16 %v29
  %v70 = vunpack.c.l.b16 %v30
  %v71 = vpack.c.b16 %v56, %v55
  %v72 = vpack.c.b16 %v58, %v57
  %v73 = vpack.c.b16 %v60, %v59
  %v74 = vpack.c.b16 %v62, %v61
  %v75 = vpack.c.b16 %v64, %v63
  %v76 = vpack.c.b16 %v66, %v65
  %v77 = vpack.c.b16 %v68, %v67
  %v78 = vpack.c.b16 %v70, %v69
  %vm79 = vcmask 64512
  %v81 = vsel %vm79, %v71, 0
  %v84 = vsel %vm79, %v72, 0
  %v87 = vsel %vm79, %v73, 0
  %v90 = vsel %vm79, %v74, 0
  %v93 = vsel %vm79, %v75, 0
  %v96 = vsel %vm79, %v76, 0
  %v99 = vsel %vm79, %v77, 0
  %v102 = vsel %vm79, %v78, 0
  %vm104 = vcmask 1043456
  %v106 = vsel %vm104, %v31, 0
  %108 = vmatprep.subr.bf16.mxu0 0
  %109 = vmatpush1.bf16.msra.mxu0 0
  %110 = vmatprep.subr.bf16.mxu0 0
  %111 = vmatpush1.bf16.msra.mxu0 0
  %112 = vmatprep.subr.bf16.mxu0 0
  %113 = vmatpush1.bf16.msra.mxu0 0
  %114 = vmatprep.subr.bf16.mxu0 0
  %115 = vmatpush1.bf16.msra.mxu0 0
  %116 = vmatprep.subr.bf16.mxu0 0
  %117 = vmatpush1.bf16.msra.mxu0 0
  %118 = vmatprep.subr.bf16.mxu0 0
  %119 = vmatpush1.bf16.msra.mxu0 0
  %120 = vmatprep.subr.bf16.mxu0 0
  %121 = vmatpush1.bf16.msra.mxu0 0
  %122 = vmatprep.subr.bf16.mxu0 0
  %123 = vmatpush1.bf16.msra.mxu0 %v106
  %124 = vmatprep.subr.bf16.mxu0 0
  %125 = vmatpush2.bf16.msra.mxu0 0
  %126 = vmatprep.subr.bf16.mxu0 0
  %127 = vmatpush2.bf16.msra.mxu0 0
  %128 = vmatprep.subr.bf16.mxu0 0
  %129 = vmatpush2.bf16.msra.mxu0 0
  %130 = vmatprep.subr.bf16.mxu0 0
  %131 = vmatpush2.bf16.msra.mxu0 0
  %132 = vmatprep.subr.bf16.mxu0 0
  %133 = vmatpush2.bf16.msra.mxu0 0
  %134 = vmatprep.subr.bf16.mxu0 0
  %135 = vmatpush2.bf16.msra.mxu0 0
  %136 = vmatprep.subr.bf16.mxu0 0
  %137 = vmatpush2.bf16.msra.mxu0 0
  %138 = vmatprep.subr.bf16.mxu0 0
  %139 = vmatpush2.bf16.msra.mxu0 0
  %140 = vmatprep.mubr.bf16.mxu0 0
  %141 = vmatmul.mubr.bf16.gmra.mxu0 %v81
  %v142 = vpop.f32.mrf.mxu0
  %v143 = vadd.f32 %v37, %v142
  %v144 = vpop.f32.mrf.mxu0
  %v145 = vpop.f32.mrf.mxu0
  %v146 = vadd.f32 %v37, %v145
  %v147 = vpop.f32.mrf.mxu0
  %148 = vmatprep.mubr.bf16.mxu0 0
  %149 = vmatmul.mubr.bf16.gmra.mxu0 %v84
  %v150 = vpop.f32.mrf.mxu0
  %v151 = vadd.f32 %v37, %v150
  %v152 = vpop.f32.mrf.mxu0
  %v153 = vpop.f32.mrf.mxu0
  %v154 = vadd.f32 %v37, %v153
  %v155 = vpop.f32.mrf.mxu0
  %156 = vmatprep.mubr.bf16.mxu0 0
  %157 = vmatmul.mubr.bf16.gmra.mxu0 %v87
  %v158 = vpop.f32.mrf.mxu0
  %v159 = vadd.f32 %v37, %v158
  %v160 = vpop.f32.mrf.mxu0
  %v161 = vpop.f32.mrf.mxu0
  %v162 = vadd.f32 %v37, %v161
  %v163 = vpop.f32.mrf.mxu0
  %164 = vmatprep.mubr.bf16.mxu0 0
  %165 = vmatmul.mubr.bf16.gmra.mxu0 %v90
  %v166 = vpop.f32.mrf.mxu0
  %v167 = vadd.f32 %v37, %v166
  %v168 = vpop.f32.mrf.mxu0
  %v169 = vpop.f32.mrf.mxu0
  %v170 = vadd.f32 %v37, %v169
  %v171 = vpop.f32.mrf.mxu0
  %172 = vmatprep.mubr.bf16.mxu0 0
  %173 = vmatmul.mubr.bf16.gmra.mxu0 %v93
  %v174 = vpop.f32.mrf.mxu0
  %v175 = vadd.f32 %v37, %v174
  %v176 = vpop.f32.mrf.mxu0
  %v177 = vpop.f32.mrf.mxu0
  %v178 = vadd.f32 %v37, %v177
  %v179 = vpop.f32.mrf.mxu0
  %180 = vmatprep.mubr.bf16.mxu0 0
  %181 = vmatmul.mubr.bf16.gmra.mxu0 %v96
  %v182 = vpop.f32.mrf.mxu0
  %v183 = vadd.f32 %v37, %v182
  %v184 = vpop.f32.mrf.mxu0
  %v185 = vpop.f32.mrf.mxu0
  %v186 = vadd.f32 %v37, %v185
  %v187 = vpop.f32.mrf.mxu0
  %188 = vmatprep.mubr.bf16.mxu0 0
  %189 = vmatmul.mubr.bf16.gmra.mxu0 %v99
  %v190 = vpop.f32.mrf.mxu0
  %v191 = vadd.f32 %v37, %v190
  %v192 = vpop.f32.mrf.mxu0
  %v193 = vpop.f32.mrf.mxu0
  %v194 = vadd.f32 %v37, %v193
  %v195 = vpop.f32.mrf.mxu0
  %196 = vmatprep.mubr.bf16.mxu0 0
  %197 = vmatmul.mubr.bf16.gmra.mxu0 %v102
  %v198 = vpop.f32.mrf.mxu0
  %v199 = vadd.f32 %v37, %v198
  %v200 = vpop.f32.mrf.mxu0
  %v201 = vpop.f32.mrf.mxu0
  %v202 = vadd.f32 %v37, %v201
  %v203 = vpop.f32.mrf.mxu0
  %204 = vdwg.mxu0
  %v205 = vpack.c.bf16 %v146, %v143
  %v206 = vpack.c.bf16 %v154, %v151
  %v207 = vpack.c.bf16 %v162, %v159
  %v208 = vpack.c.bf16 %v170, %v167
  %v209 = vpack.c.bf16 %v178, %v175
  %v210 = vpack.c.bf16 %v186, %v183
  %v211 = vpack.c.bf16 %v194, %v191
  %v212 = vpack.c.bf16 %v202, %v199
  %v221 = vunpack.c.l.b16 %v205
  %v222 = vunpack.c.h.b16 %v205
  %v223 = vunpack.c.l.b16 %v206
  %v224 = vunpack.c.h.b16 %v206
  %v225 = vunpack.c.l.b16 %v207
  %v226 = vunpack.c.h.b16 %v207
  %v227 = vunpack.c.l.b16 %v208
  %v228 = vunpack.c.h.b16 %v208
  %v229 = vunpack.c.l.b16 %v209
  %v230 = vunpack.c.h.b16 %v209
  %v231 = vunpack.c.l.b16 %v210
  %v232 = vunpack.c.h.b16 %v210
  %v233 = vunpack.c.l.b16 %v211
  %v234 = vunpack.c.h.b16 %v211
  %v235 = vunpack.c.l.b16 %v212
  %v236 = vunpack.c.h.b16 %v212
  %v237 = vpack.c.b16 %v221, %v221
  %v238 = vpack.c.b16 %v222, %v222
  %v239 = vpack.c.b16 %v223, %v223
  %v240 = vpack.c.b16 %v224, %v224
  %v241 = vpack.c.b16 %v225, %v225
  %v242 = vpack.c.b16 %v226, %v226
  %v243 = vpack.c.b16 %v227, %v227
  %v244 = vpack.c.b16 %v228, %v228
  %v245 = vpack.c.b16 %v229, %v229
  %v246 = vpack.c.b16 %v230, %v230
  %v247 = vpack.c.b16 %v231, %v231
  %v248 = vpack.c.b16 %v232, %v232
  %v249 = vpack.c.b16 %v233, %v233
  %v250 = vpack.c.b16 %v234, %v234
  %v251 = vpack.c.b16 %v235, %v235
  %v252 = vpack.c.b16 %v236, %v236
  %vm269 = vcmask 257024
  %270 = vst.msk [vmem:[%s3] sm:$0xf] %vm269, %v237
  %271 = vst.msk [vmem:[%s3 + $0x4] sm:$0xf] %vm269, %v238
  %272 = vst.msk [vmem:[%s3 + $0x8] sm:$0xf] %vm269, %v239
  %273 = vst.msk [vmem:[%s3 + $0xc] sm:$0xf] %vm269, %v240
  %274 = vst.msk [vmem:[%s3 + $0x10] sm:$0xf] %vm269, %v241
  %275 = vst.msk [vmem:[%s3 + $0x14] sm:$0xf] %vm269, %v242
  %276 = vst.msk [vmem:[%s3 + $0x18] sm:$0xf] %vm269, %v243
  %277 = vst.msk [vmem:[%s3 + $0x1c] sm:$0xf] %vm269, %v244
  %278 = vst.msk [vmem:[%s3 + $0x20] sm:$0xf] %vm269, %v245
  %279 = vst.msk [vmem:[%s3 + $0x24] sm:$0xf] %vm269, %v246
  %280 = vst.msk [vmem:[%s3 + $0x28] sm:$0xf] %vm269, %v247
  %281 = vst.msk [vmem:[%s3 + $0x2c] sm:$0xf] %vm269, %v248
  %282 = vst.msk [vmem:[%s3 + $0x30] sm:$0xf] %vm269, %v249
  %283 = vst.msk [vmem:[%s3 + $0x34] sm:$0xf] %vm269, %v250
  %284 = vst.msk [vmem:[%s3 + $0x38] sm:$0xf] %vm269, %v251
  %285 = vst.msk [vmem:[%s3 + $0x3c] sm:$0xf] %vm269, %v252
  // Predicated region
  $region14: #{tpu_custom_call.1} parent=0 // pred_check
    _
  $region15: #{tpu_custom_call.1} parent=0 // pred_check_branch
    %287 = sbr.rel (0) target = $region17
  $region16: #{tpu_custom_call.1} parent=0 // pred_region
    _
  $region17: #{tpu_custom_call.1} parent=0 // pred_fallthru
    _
  // Predicated region
  $region18: #{tpu_custom_call.1} parent=0 // pred_check
    _
  $region19: #{tpu_custom_call.1} parent=0 // pred_check_branch
    %289 = sbr.rel (0) target = $region21
  $region20: #{tpu_custom_call.1} parent=0 // pred_region
    _
  $region21: #{tpu_custom_call.1} parent=0 // pred_fallthru
    _

</llo_original>
